<compile_context>
chip_gen: v7x
topology: tpu7x:2x2x1
jax: 0.10.0
libtpu: 0.0.40
codegen_flags: <defaults>
</compile_context>

<pallas_src>
import jax
import jax.numpy as jnp
from jax.experimental import pallas as pl
from jax.experimental.pallas import tpu as pltpu

LOSS_WEIGHT = (1.0, 0.5, 0.05)


def _hms_sed_loss_kernel(ykl_ref, tkl_ref, yfw_ref, tfw_ref, out_ref, acc_ref):
    """Grid axis 0 tiles the framewise rows (lane axis).

    ykl_ref : (2B, C)  stacked [y ; y_specwise] logits        (resident)
    tkl_ref : (2B, C)  stacked [target ; target]              (resident)
    yfw_ref : (C, TILE) framewise logits tile (lane-dense)
    tfw_ref : (C, TILE) framewise targets tile (lane-dense)
    out_ref : (1, 1)   scalar loss in SMEM
    acc_ref : SMEM (2,) float32 accumulators: [sum(bce*mask), nnz]
    """
    w0, w1, w2 = LOSS_WEIGHT
    i = pl.program_id(0)

    @pl.when(i == 0)
    def _init():
        acc_ref[0] = 0.0
        acc_ref[1] = 0.0

    # ---- framewise BCE partial sums on the (C, TILE) lane-dense tile ----
    x = yfw_ref[...].astype(jnp.float32)
    tf = tfw_ref[...].astype(jnp.float32)
    # BCEWithLogitsLoss(reduction='none'), numerically stable form.
    bce = jnp.maximum(x, 0.0) - x * tf + jnp.log1p(jnp.exp(-jnp.abs(x)))
    # mask = target_framewise.sum over classes -> sublane reduce, shape (1, TILE)
    mask = jnp.sum(tf, axis=0, keepdims=True)
    acc_ref[0] += jnp.sum(bce * mask)
    acc_ref[1] += jnp.sum(jnp.where(mask != 0.0, 1.0, 0.0))

    @pl.when(i == pl.num_programs(0) - 1)
    def _finalize():
        # ---- fused KL terms (batchmean, xlogy convention) ----
        logits = ykl_ref[...].astype(jnp.float32)          # (2B, C)
        t = tkl_ref[...].astype(jnp.float32)               # (2B, C)
        bsz = logits.shape[0] // 2                         # static python int

        m = jnp.max(logits, axis=1, keepdims=True)
        z = logits - m
        lse = jnp.log(jnp.sum(jnp.exp(z), axis=1, keepdims=True))
        logsm = z - lse
        safe_log_t = jnp.log(jnp.where(t > 0.0, t, 1.0))   # no NaN in dead branch
        xlogy = jnp.where(t > 0.0, t * safe_log_t, 0.0)
        kl_rows = jnp.sum(xlogy - t * logsm, axis=1, keepdims=True)   # (2B, 1)
        kl_full = jnp.sum(kl_rows[:bsz, :])                # KL(target || softmax(y))
        kl_spec = jnp.sum(kl_rows[bsz:, :])                # KL(target || softmax(y_spec))

        # Unguarded divide matches PyTorch when no framewise row is active.
        frame_loss = acc_ref[0] / acc_ref[1]
        out_ref[0, 0] = (w0 * kl_full + w1 * kl_spec) / bsz + w2 * frame_loss


def hms_sed_loss(y, y_framewise, y_specwise, target, target_framewise, *, tile=32768):
    b, frame, c = y_framewise.shape
    n = b * frame

    # Lane-dense layout: put B*frame on the lane (last) axis, classes on sublanes.
    yfw_t = jnp.transpose(y_framewise.reshape(n, c))           # (C, N)
    tfw_t = jnp.transpose(target_framewise.reshape(n, c))      # (C, N)

    # Tile must be a multiple of 128; cap it by the (128-rounded) row count.
    tile = max(128, min(tile, pl.cdiv(n, 128) * 128))
    n_pad = pl.cdiv(n, tile) * tile
    if n_pad != n:
        # Zero padding is safe: padded columns have mask == 0, so they add
        # nothing to sum(bce*mask) and are not counted in nnz.
        yfw_t = jnp.pad(yfw_t, ((0, 0), (0, n_pad - n)))
        tfw_t = jnp.pad(tfw_t, ((0, 0), (0, n_pad - n)))
    num_tiles = n_pad // tile

    # Fuse the two KL passes: stack full-clip and spectrogram logits row-wise.
    ykl = jnp.concatenate([y, y_specwise], axis=0)              # (2B, C)
    tkl = jnp.concatenate([target, target], axis=0)             # (2B, C)

    out = pl.pallas_call(
        _hms_sed_loss_kernel,
        out_shape=jax.ShapeDtypeStruct((1, 1), jnp.float32),
        grid_spec=pltpu.PrefetchScalarGridSpec(
            num_scalar_prefetch=0,
            grid=(num_tiles,),
            in_specs=[
                pl.BlockSpec((2 * b, c), lambda i: (0, 0)),     # ykl (resident)
                pl.BlockSpec((2 * b, c), lambda i: (0, 0)),     # tkl (resident)
                pl.BlockSpec((c, tile), lambda i: (0, i)),      # framewise logits
                pl.BlockSpec((c, tile), lambda i: (0, i)),      # framewise targets
            ],
            out_specs=pl.BlockSpec(
                (1, 1), lambda i: (0, 0),
                memory_space=pltpu.MemorySpace.SMEM),
            scratch_shapes=[pltpu.SMEM((2,), jnp.float32)],
        ),
        compiler_params=pltpu.CompilerParams(
            dimension_semantics=("arbitrary",)),                # reduction axis
    )(ykl, tkl, yfw_t, tfw_t)
    return out[0, 0]


def _reference(y, y_framewise, y_specwise, target, target_framewise):
    # Pure-JAX reference for validation.
    w0, w1, w2 = LOSS_WEIGHT

    def kl(logits, tgt):
        logsm = jax.nn.log_softmax(logits, axis=1)
        xlogy = jnp.where(tgt > 0, tgt * jnp.log(jnp.where(tgt > 0, tgt, 1.0)), 0.0)
        return jnp.sum(xlogy - tgt * logsm) / logits.shape[0]

    b, frame, c = y_framewise.shape
    x = y_framewise.reshape(-1, c)
    tf = target_framewise.reshape(-1, c)
    bce = jnp.maximum(x, 0.0) - x * tf + jnp.log1p(jnp.exp(-jnp.abs(x)))
    mask = jnp.sum(tf, axis=1, keepdims=True)
    nnz = jnp.sum(mask != 0.0)
    frame_loss = jnp.sum(bce * mask) / nnz
    return w0 * kl(y, target) + w1 * kl(y_specwise, target) + w2 * frame_loss


if __name__ == "__main__":
    key = jax.random.PRNGKey(0)
    kb = jax.random.split(key, 6)

    B, FRAME, C = 4, 80, 6  # HMS-like: 6 vote classes; B*FRAME=320 rows

    y = jax.random.normal(kb[0], (B, C), jnp.float32)
    y_specwise = jax.random.normal(kb[1], (B, C), jnp.float32)
    y_framewise = jax.random.normal(kb[2], (B, FRAME, C), jnp.float32)

    # target: probability distributions over classes (softmax of random logits)
    target = jax.nn.softmax(jax.random.normal(kb[3], (B, C), jnp.float32), axis=1)
    # target_framewise: multi-hot labels; some rows all-zero to exercise the mask
    target_framewise = (
        jax.random.uniform(kb[4], (B, FRAME, C), jnp.float32) < 0.3
    ).astype(jnp.float32)

    ref = _reference(y, y_framewise, y_specwise, target, target_framewise)

    # Multi-tile path (320 rows -> padded to 384, grid of 3 tiles of 128 lanes).
    loss_tiled = hms_sed_loss(
        y, y_framewise, y_specwise, target, target_framewise, tile=128)
    loss_tiled = jax.block_until_ready(loss_tiled)
    assert jnp.allclose(loss_tiled, ref, rtol=1e-4, atol=1e-5), (loss_tiled, ref)

    # Single-tile (default tile) path.
    loss_single = hms_sed_loss(y, y_framewise, y_specwise, target, target_framewise)
    loss_single = jax.block_until_ready(loss_single)
    assert jnp.allclose(loss_single, ref, rtol=1e-4, atol=1e-5), (loss_single, ref)

    print("KERNEL_OK")
</pallas_src>

<mosaic_0001>
module attributes {stable_mosaic.version = 11 : i64} {
  func.func @_hms_sed_loss_kernel(%arg0: i32, %arg1: memref<8x6xf32, #tpu.memory_space<vmem>>, %arg2: memref<8x6xf32, #tpu.memory_space<vmem>>, %arg3: memref<6x128xf32, #tpu.memory_space<vmem>>, %arg4: memref<6x128xf32, #tpu.memory_space<vmem>>, %arg5: memref<1x1xf32, #tpu.memory_space<smem>>, %arg6: memref<2xf32, #tpu.memory_space<smem>>) attributes {dimension_semantics = [#tpu.dimension_semantics<arbitrary>], iteration_bounds = array<i64: 3>, scalar_prefetch = 0 : i64, scratch_operands = 1 : i64, tpu.core_type = #tpu.core_type<tc>, window_params = [{pipeline_mode = #tpu.pipeline_mode<synchronous>, transform_indices = @transform_0, window_bounds = array<i64: 8, 6>}, {pipeline_mode = #tpu.pipeline_mode<synchronous>, transform_indices = @transform_1, window_bounds = array<i64: 8, 6>}, {transform_indices = @transform_2, window_bounds = array<i64: 6, 128>}, {transform_indices = @transform_3, window_bounds = array<i64: 6, 128>}, {transform_indices = @transform_4, window_bounds = array<i64: 1, 1>}]} {
    %c0_i32 = arith.constant 0 : i32
    %0 = arith.cmpi eq, %arg0, %c0_i32 : i32
    %1 = arith.extui %0 : i1 to i32
    %c0_i32_0 = arith.constant 0 : i32
    %2 = arith.cmpi ne, %1, %c0_i32_0 : i32
    scf.if %2 {
      %cst_15 = arith.constant 0.000000e+00 : f32
      %c0_16 = arith.constant 0 : index
      %41 = memref.load %arg6[%c0_16] : memref<2xf32, #tpu.memory_space<smem>>
      memref.store %cst_15, %arg6[%c0_16] : memref<2xf32, #tpu.memory_space<smem>>
      %cst_17 = arith.constant 0.000000e+00 : f32
      %c1_18 = arith.constant 1 : index
      %42 = memref.load %arg6[%c1_18] : memref<2xf32, #tpu.memory_space<smem>>
      memref.store %cst_17, %arg6[%c1_18] : memref<2xf32, #tpu.memory_space<smem>>
    } else {
    }
    %c0 = arith.constant 0 : index
    %c0_1 = arith.constant 0 : index
    %3 = vector.load %arg3[%c0, %c0_1] : memref<6x128xf32, #tpu.memory_space<vmem>>, vector<6x128xf32>
    %c0_2 = arith.constant 0 : index
    %c0_3 = arith.constant 0 : index
    %4 = vector.load %arg4[%c0_2, %c0_3] : memref<6x128xf32, #tpu.memory_space<vmem>>, vector<6x128xf32>
    %cst = arith.constant 0.000000e+00 : f32
    %5 = vector.broadcast %cst : f32 to vector<6x128xf32>
    %6 = arith.maximumf %3, %5 : vector<6x128xf32>
    %7 = arith.mulf %3, %4 : vector<6x128xf32>
    %8 = arith.subf %6, %7 : vector<6x128xf32>
    %9 = math.absf %3 : vector<6x128xf32>
    %cst_4 = arith.constant 0.000000e+00 : f32
    %10 = vector.broadcast %cst_4 : f32 to vector<6x128xf32>
    %11 = arith.subf %10, %9 : vector<6x128xf32>
    %12 = math.exp %11 : vector<6x128xf32>
    %13 = math.log1p %12 : vector<6x128xf32>
    %14 = arith.addf %8, %13 : vector<6x128xf32>
    %cst_5 = arith.constant dense<0.000000e+00> : vector<128xf32>
    %15 = vector.multi_reduction <add>, %4, %cst_5 [0] : vector<6x128xf32> to vector<128xf32>
    %16 = vector.shape_cast %15 : vector<128xf32> to vector<1x128xf32>
    %c0_6 = arith.constant 0 : index
    %17 = memref.load %arg6[%c0_6] : memref<2xf32, #tpu.memory_space<smem>>
    %18 = vector.broadcast %16 : vector<1x128xf32> to vector<6x128xf32>
    %19 = arith.mulf %14, %18 : vector<6x128xf32>
    %20 = vector.shape_cast %19 : vector<6x128xf32> to vector<1x6x128xf32>
    %cst_7 = arith.constant dense<0.000000e+00> : vector<1xf32>
    %21 = vector.multi_reduction <add>, %20, %cst_7 [1, 2] : vector<1x6x128xf32> to vector<1xf32>
    %22 = vector.shape_cast %21 : vector<1xf32> to vector<1x1x1xf32>
    %23 = vector.extract %22[0, 0, 0] : f32 from vector<1x1x1xf32>
    %24 = arith.addf %17, %23 : f32
    %c0_8 = arith.constant 0 : index
    %25 = memref.load %arg6[%c0_8] : memref<2xf32, #tpu.memory_space<smem>>
    memref.store %24, %arg6[%c0_8] : memref<2xf32, #tpu.memory_space<smem>>
    %c1 = arith.constant 1 : index
    %26 = memref.load %arg6[%c1] : memref<2xf32, #tpu.memory_space<smem>>
    %cst_9 = arith.constant 0.000000e+00 : f32
    %27 = vector.broadcast %cst_9 : f32 to vector<1x128xf32>
    %28 = arith.cmpf one, %16, %27 : vector<1x128xf32>
    %cst_10 = arith.constant 1.000000e+00 : f32
    %cst_11 = arith.constant 0.000000e+00 : f32
    %29 = vector.broadcast %cst_10 : f32 to vector<1x128xf32>
    %30 = vector.broadcast %cst_11 : f32 to vector<1x128xf32>
    %31 = arith.select %28, %29, %30 : vector<1x128xi1>, vector<1x128xf32>
    %32 = vector.shape_cast %31 : vector<1x128xf32> to vector<1x1x128xf32>
    %cst_12 = arith.constant dense<0.000000e+00> : vector<1xf32>
    %33 = vector.multi_reduction <add>, %32, %cst_12 [1, 2] : vector<1x1x128xf32> to vector<1xf32>
    %34 = vector.shape_cast %33 : vector<1xf32> to vector<1x1x1xf32>
    %35 = vector.extract %34[0, 0, 0] : f32 from vector<1x1x1xf32>
    %36 = arith.addf %26, %35 : f32
    %c1_13 = arith.constant 1 : index
    %37 = memref.load %arg6[%c1_13] : memref<2xf32, #tpu.memory_space<smem>>
    memref.store %36, %arg6[%c1_13] : memref<2xf32, #tpu.memory_space<smem>>
    %c2_i32 = arith.constant 2 : i32
    %38 = arith.cmpi eq, %arg0, %c2_i32 : i32
    %39 = arith.extui %38 : i1 to i32
    %c0_i32_14 = arith.constant 0 : i32
    %40 = arith.cmpi ne, %39, %c0_i32_14 : i32
    scf.if %40 {
      %c0_15 = arith.constant 0 : index
      %c0_16 = arith.constant 0 : index
      %41 = vector.load %arg1[%c0_15, %c0_16] : memref<8x6xf32, #tpu.memory_space<vmem>>, vector<8x6xf32>
      %c0_17 = arith.constant 0 : index
      %c0_18 = arith.constant 0 : index
      %42 = vector.load %arg2[%c0_17, %c0_18] : memref<8x6xf32, #tpu.memory_space<vmem>>, vector<8x6xf32>
      %cst_19 = arith.constant dense<0xFF800000> : vector<8xf32>
      %43 = vector.multi_reduction <maximumf>, %41, %cst_19 [1] : vector<8x6xf32> to vector<8xf32>
      %44 = vector.shape_cast %43 : vector<8xf32> to vector<8x1xf32>
      %45 = vector.broadcast %44 : vector<8x1xf32> to vector<8x6xf32>
      %46 = arith.subf %41, %45 : vector<8x6xf32>
      %47 = math.exp %46 : vector<8x6xf32>
      %cst_20 = arith.constant dense<0.000000e+00> : vector<8xf32>
      %48 = vector.multi_reduction <add>, %47, %cst_20 [1] : vector<8x6xf32> to vector<8xf32>
      %49 = vector.shape_cast %48 : vector<8xf32> to vector<8x1xf32>
      %50 = math.log %49 : vector<8x1xf32>
      %51 = vector.broadcast %50 : vector<8x1xf32> to vector<8x6xf32>
      %52 = arith.subf %46, %51 : vector<8x6xf32>
      %cst_21 = arith.constant 0.000000e+00 : f32
      %53 = vector.broadcast %cst_21 : f32 to vector<8x6xf32>
      %54 = arith.cmpf ogt, %42, %53 : vector<8x6xf32>
      %cst_22 = arith.constant 1.000000e+00 : f32
      %55 = vector.broadcast %cst_22 : f32 to vector<8x6xf32>
      %56 = arith.select %54, %42, %55 : vector<8x6xi1>, vector<8x6xf32>
      %57 = math.log %56 : vector<8x6xf32>
      %cst_23 = arith.constant 0.000000e+00 : f32
      %58 = vector.broadcast %cst_23 : f32 to vector<8x6xf32>
      %59 = arith.cmpf ogt, %42, %58 : vector<8x6xf32>
      %60 = arith.mulf %42, %57 : vector<8x6xf32>
      %cst_24 = arith.constant 0.000000e+00 : f32
      %61 = vector.broadcast %cst_24 : f32 to vector<8x6xf32>
      %62 = arith.select %59, %60, %61 : vector<8x6xi1>, vector<8x6xf32>
      %63 = arith.mulf %42, %52 : vector<8x6xf32>
      %64 = arith.subf %62, %63 : vector<8x6xf32>
      %cst_25 = arith.constant dense<0.000000e+00> : vector<8xf32>
      %65 = vector.multi_reduction <add>, %64, %cst_25 [1] : vector<8x6xf32> to vector<8xf32>
      %66 = vector.shape_cast %65 : vector<8xf32> to vector<8x1xf32>
      %67 = vector.extract_strided_slice %66 {offsets = [0, 0], sizes = [4, 1], strides = [1, 1]} : vector<8x1xf32> to vector<4x1xf32>
      %68 = vector.shape_cast %67 : vector<4x1xf32> to vector<1x4x1xf32>
      %cst_26 = arith.constant dense<0.000000e+00> : vector<1xf32>
      %69 = vector.multi_reduction <add>, %68, %cst_26 [1, 2] : vector<1x4x1xf32> to vector<1xf32>
      %70 = vector.shape_cast %69 : vector<1xf32> to vector<1x1x1xf32>
      %71 = vector.extract %70[0, 0, 0] : f32 from vector<1x1x1xf32>
      %72 = vector.extract_strided_slice %66 {offsets = [4, 0], sizes = [4, 1], strides = [1, 1]} : vector<8x1xf32> to vector<4x1xf32>
      %73 = vector.shape_cast %72 : vector<4x1xf32> to vector<1x4x1xf32>
      %cst_27 = arith.constant dense<0.000000e+00> : vector<1xf32>
      %74 = vector.multi_reduction <add>, %73, %cst_27 [1, 2] : vector<1x4x1xf32> to vector<1xf32>
      %75 = vector.shape_cast %74 : vector<1xf32> to vector<1x1x1xf32>
      %76 = vector.extract %75[0, 0, 0] : f32 from vector<1x1x1xf32>
      %c0_28 = arith.constant 0 : index
      %77 = memref.load %arg6[%c0_28] : memref<2xf32, #tpu.memory_space<smem>>
      %c1_29 = arith.constant 1 : index
      %78 = memref.load %arg6[%c1_29] : memref<2xf32, #tpu.memory_space<smem>>
      %79 = arith.divf %77, %78 : f32
      %cst_30 = arith.constant 1.000000e+00 : f32
      %80 = arith.mulf %cst_30, %71 : f32
      %cst_31 = arith.constant 5.000000e-01 : f32
      %81 = arith.mulf %cst_31, %76 : f32
      %82 = arith.addf %80, %81 : f32
      %cst_32 = arith.constant 4.000000e+00 : f32
      %83 = arith.divf %82, %cst_32 : f32
      %cst_33 = arith.constant 5.000000e-02 : f32
      %84 = arith.mulf %cst_33, %79 : f32
      %85 = arith.addf %83, %84 : f32
      %c0_34 = arith.constant 0 : index
      %c0_35 = arith.constant 0 : index
      %86 = memref.load %arg5[%c0_34, %c0_35] : memref<1x1xf32, #tpu.memory_space<smem>>
      memref.store %85, %arg5[%c0_34, %c0_35] : memref<1x1xf32, #tpu.memory_space<smem>>
    } else {
    }
    return
  }
  func.func @transform_0(%arg0: i32) -> (i32, i32) {
    %c0_i32 = arith.constant 0 : i32
    %c0_i32_0 = arith.constant 0 : i32
    %c0_i32_1 = arith.constant 0 : i32
    return %c0_i32, %c0_i32_0 : i32, i32
  }
  func.func @transform_1(%arg0: i32) -> (i32, i32) {
    %c0_i32 = arith.constant 0 : i32
    %c0_i32_0 = arith.constant 0 : i32
    %c0_i32_1 = arith.constant 0 : i32
    return %c0_i32, %c0_i32_0 : i32, i32
  }
  func.func @transform_2(%arg0: i32) -> (i32, i32) {
    %c0_i32 = arith.constant 0 : i32
    %c0_i32_0 = arith.constant 0 : i32
    return %c0_i32, %arg0 : i32, i32
  }
  func.func @transform_3(%arg0: i32) -> (i32, i32) {
    %c0_i32 = arith.constant 0 : i32
    %c0_i32_0 = arith.constant 0 : i32
    return %c0_i32, %arg0 : i32, i32
  }
  func.func @transform_4(%arg0: i32) -> (i32, i32) {
    %c0_i32 = arith.constant 0 : i32
    %c0_i32_0 = arith.constant 0 : i32
    %c0_i32_1 = arith.constant 0 : i32
    return %c0_i32, %c0_i32_0 : i32, i32
  }
}

</mosaic_0001>

<llo_original>
// kernel: tpu_custom_call.1
$region0: #{tpu_custom_call.1}
  #allocation0 [shape = 'u32[]', space=smem, size = 0x4, offset = 0x4, fixed_abs, tag = 'smem constant byte address 0x4 - core index']
  #allocation1 [shape = 'u32[144,128]{1,0:T(1,128)}', space=vmem, size = 0x12000, scoped, tag = 'internal scratch']
  #allocation2 [shape = 'f32[2]{0:T(128)}', space=smem, size = 0x200, scoped, tag = 'scratch operand']
  %s0 = inlined_call_operand.hbm [shape: f32[8,6], index: 0, kind: input, shape index: {}]
  %s1 = inlined_call_operand.hbm [shape: f32[8,6], index: 1, kind: input, shape index: {}]
  %s2 = inlined_call_operand.hbm [shape: f32[6,384], index: 2, kind: input, shape index: {}]
  %s3 = inlined_call_operand.hbm [shape: f32[6,384], index: 3, kind: input, shape index: {}]
  %s4 = inlined_call_operand.hbm [shape: f32[1,1], index: 4, kind: output, shape index: {}]
  %s5 = sld [smem:[#allocation0]]
  $region73: #{tpu_custom_call.1} parent=0
    _
  %s7 = ssub.s32 1, %s5
  %s8 = scalar_select 0, %s7, %s5
  $region1: #{tpu_custom_call.1} parent=0
    #allocation3 [shape = 'u8[4096]{0}', space=vmem, size = 0x1000, scoped, tag = 'input window, operand 0, single buffered']
    #allocation4 [shape = 's32[2]{0}', space=sflag, size = 0x8, scoped, tag = 'scoped memory for tpu_custom_call.1']
    #allocation5 [shape = 's32[2]{0}', space=sflag, size = 0x8, scoped, tag = 'scoped memory for tpu_custom_call.1']
    #allocation6 [shape = 'u8[4096]{0}', space=vmem, size = 0x1000, scoped, tag = 'input window, operand 1, single buffered']
    #allocation7 [shape = 's32[1]{0}', space=sflag, size = 0x4, scoped, tag = 'scoped memory for tpu_custom_call.1']
    #allocation8 [shape = 'u8[8192]{0}', space=vmem, size = 0x2000, scoped, tag = 'input window, operand 2']
    #allocation9 [shape = 'u8[8192]{0}', space=vmem, size = 0x2000, scoped, tag = 'input window, operand 3']
    #allocation10 [shape = 'u8[512]{0}', space=smem, size = 0x200, scoped, tag = 'output window, operand 0, single buffered']
    %9 = vsyncpa [#allocation4], 0
    %10 = vsyncpa [#allocation7], 0
    %11 = vsyncpa [#allocation5], 0
    loop: start=0, step=1, limit=5
    $region2: #{tpu_custom_call.1} parent=1 // loop_pre_header
      _
    $region3: #{tpu_custom_call.1} parent=1 // loop_header
      %s13 = sphi 0, %s17
      %p14 = scmp.ge.s32.totalorder %s13, 5
      %s21 = sphi 0, %s21
      %s23 = sphi 0, %s21
      %s24 = sphi 0, %s23
      %s38 = sphi 0, %s24
      %s42 = sphi 0, %s42
      %s44 = sphi 0, %s42
      %s45 = sphi 0, %s44
      %s59 = sphi 0, %s45
      %s65 = sphi 0, %s67
      %s68 = sphi 0, %s65
      %s69 = sphi 0, %s68
      %s85 = sphi 0, %s69
      %s91 = sphi 0, %s93
      %s94 = sphi 0, %s91
      %s95 = sphi 0, %s94
      %s111 = sphi 0, %s95
      %s115 = sphi 0, %s115
      %s117 = sphi 0, %s115
      %s118 = sphi 0, %s117
      %s132 = sphi 0, %s118
    $region4: #{tpu_custom_call.1} parent=1 // loop_header_branch
      %16 = sbr.rel (%p14) target = $region8
    $region5: #{tpu_custom_call.1} parent=1 // loop_body
      %s18 = ssub.s32 %s13, 1
      %s19 = ssub.s32 %s13, 2
      %s20 = sadd.s32 %s13, 1
      %s22 = sadd.s32 %s21, 1
      %p25 = scmp.eq.s32.totalorder %s13, 2
      %p26 = scmp.ne.s32.totalorder %s21, %s23
      %p27 = scmp.eq.s32.totalorder %s13, 0
      %p28 = por %p26, %p27
      %p29 = scmp.ne.s32.totalorder %s21, %s23
      %p30 = scmp.eq.s32.totalorder %s18, 2
      %p31 = por %p29, %p30
      %p32 = scmp.ne.s32.totalorder %s23, %s24
      %p33 = scmp.eq.s32.totalorder %s18, 0
      %p34 = por %p32, %p33
      %p35 = scmp.ne.s32.totalorder %s23, %s24
      %p36 = scmp.eq.s32.totalorder %s19, 2
      %p37 = por %p35, %p36
      %p39 = scmp.ne.s32.totalorder %s24, %s38
      %p40 = scmp.eq.s32.totalorder %s19, 0
      %p41 = por %p39, %p40
      %s43 = sadd.s32 %s42, 1
      %p46 = scmp.eq.s32.totalorder %s13, 2
      %p47 = scmp.ne.s32.totalorder %s42, %s44
      %p48 = scmp.eq.s32.totalorder %s13, 0
      %p49 = por %p47, %p48
      %p50 = scmp.ne.s32.totalorder %s42, %s44
      %p51 = scmp.eq.s32.totalorder %s18, 2
      %p52 = por %p50, %p51
      %p53 = scmp.ne.s32.totalorder %s44, %s45
      %p54 = scmp.eq.s32.totalorder %s18, 0
      %p55 = por %p53, %p54
      %p56 = scmp.ne.s32.totalorder %s44, %s45
      %p57 = scmp.eq.s32.totalorder %s19, 2
      %p58 = por %p56, %p57
      %p60 = scmp.ne.s32.totalorder %s45, %s59
      %p61 = scmp.eq.s32.totalorder %s19, 0
      %p62 = por %p60, %p61
      %s63 = ssub.s32 %s13, %s20
      %p64 = scmp.eq.s32.totalorder %s63, 0
      %s66 = sadd.s32 %s65, 1
      %s67 = scalar_select %p64, %s65, %s66
      %p70 = pneg %p64
      %p71 = scmp.eq.s32.totalorder %s13, 2
      %p72 = por %p70, %p71
      %p73 = scmp.ne.s32.totalorder %s65, %s68
      %p74 = scmp.eq.s32.totalorder %s13, 0
      %p75 = por %p73, %p74
      %p76 = scmp.ne.s32.totalorder %s65, %s68
      %p77 = scmp.eq.s32.totalorder %s18, 2
      %p78 = por %p76, %p77
      %p79 = scmp.ne.s32.totalorder %s68, %s69
      %p80 = scmp.eq.s32.totalorder %s18, 0
      %p81 = por %p79, %p80
      %p82 = scmp.ne.s32.totalorder %s68, %s69
      %p83 = scmp.eq.s32.totalorder %s19, 2
      %p84 = por %p82, %p83
      %p86 = scmp.ne.s32.totalorder %s69, %s85
      %p87 = scmp.eq.s32.totalorder %s19, 0
      %p88 = por %p86, %p87
      %s89 = ssub.s32 %s13, %s20
      %p90 = scmp.eq.s32.totalorder %s89, 0
      %s92 = sadd.s32 %s91, 1
      %s93 = scalar_select %p90, %s91, %s92
      %p96 = pneg %p90
      %p97 = scmp.eq.s32.totalorder %s13, 2
      %p98 = por %p96, %p97
      %p99 = scmp.ne.s32.totalorder %s91, %s94
      %p100 = scmp.eq.s32.totalorder %s13, 0
      %p101 = por %p99, %p100
      %p102 = scmp.ne.s32.totalorder %s91, %s94
      %p103 = scmp.eq.s32.totalorder %s18, 2
      %p104 = por %p102, %p103
      %p105 = scmp.ne.s32.totalorder %s94, %s95
      %p106 = scmp.eq.s32.totalorder %s18, 0
      %p107 = por %p105, %p106
      %p108 = scmp.ne.s32.totalorder %s94, %s95
      %p109 = scmp.eq.s32.totalorder %s19, 2
      %p110 = por %p108, %p109
      %p112 = scmp.ne.s32.totalorder %s95, %s111
      %p113 = scmp.eq.s32.totalorder %s19, 0
      %p114 = por %p112, %p113
      %s116 = sadd.s32 %s115, 1
      %p119 = scmp.eq.s32.totalorder %s13, 2
      %p120 = scmp.ne.s32.totalorder %s115, %s117
      %p121 = scmp.eq.s32.totalorder %s13, 0
      %p122 = por %p120, %p121
      %p123 = scmp.ne.s32.totalorder %s115, %s117
      %p124 = scmp.eq.s32.totalorder %s18, 2
      %p125 = por %p123, %p124
      %p126 = scmp.ne.s32.totalorder %s117, %s118
      %p127 = scmp.eq.s32.totalorder %s18, 0
      %p128 = por %p126, %p127
      %p129 = scmp.ne.s32.totalorder %s117, %s118
      %p130 = scmp.eq.s32.totalorder %s19, 2
      %p131 = por %p129, %p130
      %p133 = scmp.ne.s32.totalorder %s118, %s132
      %p134 = scmp.eq.s32.totalorder %s19, 0
      %p135 = por %p133, %p134
      %p136 = scmp.le.s32.totalorder 1, %s13
      %p137 = scmp.lt.s32.totalorder %s13, 4
      %p138 = pnand %p136, %p137
      %p139 = pneg %p138
      // Predicated region
      $region9: #{tpu_custom_call.1} parent=5 // pred_check
        _
      $region10: #{tpu_custom_call.1} parent=5 // pred_check_branch
        %141 = sbr.rel (%p138) target = $region12
      $region11: #{tpu_custom_call.1} parent=5 // pred_region
        %s142 = ssub.s32 %s13, 1
        // Predicated region
        $region13: #{tpu_custom_call.1} parent=11 // pred_check
          %p143 = pneg %p34
        $region14: #{tpu_custom_call.1} parent=11 // pred_check_branch
          %145 = sbr.rel (%p143) target = $region16
        $region15: #{tpu_custom_call.1} parent=11 // pred_region
          %s147 = ssub.s32 128, 128
          %148 = vsyncadd [#allocation4], %s147
          %s150 = sshll.u32 [#allocation3], 4
          %s151 = int_to_ptr.vmem [resolvable:$true] %s150
          %153 = dma.hbm_to_vmem [thread:$0]  %s0, 128, %s151, [#allocation4]
        $region16: #{tpu_custom_call.1} parent=11 // pred_fallthru
          _
        // Predicated region
        $region17: #{tpu_custom_call.1} parent=11 // pred_check
          %p154 = pneg %p55
        $region18: #{tpu_custom_call.1} parent=11 // pred_check_branch
          %156 = sbr.rel (%p154) target = $region20
        $region19: #{tpu_custom_call.1} parent=11 // pred_region
          %s158 = ssub.s32 128, 128
          %159 = vsyncadd [#allocation7], %s158
          %s161 = sshll.u32 [#allocation6], 4
          %s162 = int_to_ptr.vmem [resolvable:$true] %s161
          %164 = dma.hbm_to_vmem [thread:$0]  %s1, 128, %s162, [#allocation7]
        $region20: #{tpu_custom_call.1} parent=11 // pred_fallthru
          _
      $region12: #{tpu_custom_call.1} parent=5 // pred_fallthru
        _
      %p165 = scmp.lt.s32.totalorder %s13, 3
      // Predicated region
      $region21: #{tpu_custom_call.1} parent=5 // pred_check
        %p166 = pneg %p165
      $region22: #{tpu_custom_call.1} parent=5 // pred_check_branch
        %168 = sbr.rel (%p166) target = $region24
      $region23: #{tpu_custom_call.1} parent=5 // pred_region
        // Predicated region
        $region25: #{tpu_custom_call.1} parent=23 // pred_check
          %p169 = pneg %p75
        $region26: #{tpu_custom_call.1} parent=23 // pred_check_branch
          %171 = sbr.rel (%p169) target = $region28
        $region27: #{tpu_custom_call.1} parent=23 // pred_region
          %s172 = sand.u32 %s13, 1
          %s173 = scalar_lea.sflag [#allocation4], %s172
          %s174 = sand.u32 %s65, 1
          %s175 = smul.addr %s174, 8
          %s176 = scalar_lea.vmem [#allocation8], %s175
          %s178 = ssub.s32 128, 128
          %179 = vsyncadd %s173, %s178
          %s180 = smul.addr %s13, 128
          %s181 = scalar_lea.hbm %s2, %s180
          %s183 = sshll.u32 %s176, 4
          %s184 = int_to_ptr.vmem [resolvable:$true] %s183
          %186 = dma.hbm_to_vmem [thread:$0]  %s181, 128, %s184, %s173
        $region28: #{tpu_custom_call.1} parent=23 // pred_fallthru
          _
        // Predicated region
        $region29: #{tpu_custom_call.1} parent=23 // pred_check
          %p187 = pneg %p101
        $region30: #{tpu_custom_call.1} parent=23 // pred_check_branch
          %189 = sbr.rel (%p187) target = $region32
        $region31: #{tpu_custom_call.1} parent=23 // pred_region
          %s190 = sand.u32 %s13, 1
          %s191 = scalar_lea.sflag [#allocation4], %s190
          %s192 = sand.u32 %s91, 1
          %s193 = smul.addr %s192, 8
          %s194 = scalar_lea.vmem [#allocation9], %s193
          %s196 = ssub.s32 128, 128
          %197 = vsyncadd %s191, %s196
          %s198 = smul.addr %s13, 128
          %s199 = scalar_lea.hbm %s3, %s198
          %s201 = sshll.u32 %s194, 4
          %s202 = int_to_ptr.vmem [resolvable:$true] %s201
          %204 = dma.hbm_to_vmem [thread:$0]  %s199, 128, %s202, %s191
        $region32: #{tpu_custom_call.1} parent=23 // pred_fallthru
          _
      $region24: #{tpu_custom_call.1} parent=5 // pred_fallthru
        _
      %p205 = scmp.le.s32.totalorder 1, %s13
      %p206 = scmp.lt.s32.totalorder %s13, 4
      %p207 = pnand %p205, %p206
      %p208 = pneg %p207
      // Predicated region
      $region33: #{tpu_custom_call.1} parent=5 // pred_check
        _
      $region34: #{tpu_custom_call.1} parent=5 // pred_check_branch
        %210 = sbr.rel (%p207) target = $region36
      $region35: #{tpu_custom_call.1} parent=5 // pred_region
        %s211 = ssub.s32 %s13, 1
        // Predicated region
        $region37: #{tpu_custom_call.1} parent=35 // pred_check
          %p212 = pneg %p34
        $region38: #{tpu_custom_call.1} parent=35 // pred_check_branch
          %214 = sbr.rel (%p212) target = $region40
        $region39: #{tpu_custom_call.1} parent=35 // pred_region
          %215 = dma.done [#allocation4], 128
        $region40: #{tpu_custom_call.1} parent=35 // pred_fallthru
          _
        // Predicated region
        $region41: #{tpu_custom_call.1} parent=35 // pred_check
          %p216 = pneg %p55
        $region42: #{tpu_custom_call.1} parent=35 // pred_check_branch
          %218 = sbr.rel (%p216) target = $region44
        $region43: #{tpu_custom_call.1} parent=35 // pred_region
          %219 = dma.done [#allocation7], 128
        $region44: #{tpu_custom_call.1} parent=35 // pred_fallthru
          _
        %s220 = sand.u32 %s18, 1
        %s221 = scalar_lea.sflag [#allocation4], %s220
        %s222 = sand.u32 %s68, 1
        %s223 = smul.addr %s222, 8
        %s224 = scalar_lea.vmem [#allocation8], %s223
        // Predicated region
        $region45: #{tpu_custom_call.1} parent=35 // pred_check
          %p225 = pneg %p81
        $region46: #{tpu_custom_call.1} parent=35 // pred_check_branch
          %227 = sbr.rel (%p225) target = $region48
        $region47: #{tpu_custom_call.1} parent=35 // pred_region
          %228 = dma.done %s221, 128
        $region48: #{tpu_custom_call.1} parent=35 // pred_fallthru
          _
        %s229 = sand.u32 %s18, 1
        %s230 = scalar_lea.sflag [#allocation4], %s229
        %s231 = sand.u32 %s94, 1
        %s232 = smul.addr %s231, 8
        %s233 = scalar_lea.vmem [#allocation9], %s232
        // Predicated region
        $region49: #{tpu_custom_call.1} parent=35 // pred_check
          %p234 = pneg %p107
        $region50: #{tpu_custom_call.1} parent=35 // pred_check_branch
          %236 = sbr.rel (%p234) target = $region52
        $region51: #{tpu_custom_call.1} parent=35 // pred_region
          %237 = dma.done %s230, 128
        $region52: #{tpu_custom_call.1} parent=35 // pred_fallthru
          _
        %p238 = pneg %p34
        %p239 = pneg %p31
        %p240 = pneg %p55
        %p241 = pneg %p52
        %s242 = sand.u32 %s18, 1
        %s243 = scalar_lea.sflag [#allocation4], %s242
        %s244 = sand.u32 %s68, 1
        %s245 = smul.addr %s244, 8
        %s246 = scalar_lea.vmem [#allocation8], %s245
        %p247 = pneg %p81
        %p248 = pneg %p78
        %s249 = sand.u32 %s18, 1
        %s250 = scalar_lea.sflag [#allocation4], %s249
        %s251 = sand.u32 %s94, 1
        %s252 = smul.addr %s251, 8
        %s253 = scalar_lea.vmem [#allocation9], %s252
        %p254 = pneg %p107
        %p255 = pneg %p104
        %p256 = pneg %p128
        %p257 = pneg %p125
        %p258 = scmp.eq.s32.totalorder %s18, 0
        // Predicated region
        $region53: #{tpu_custom_call.1} parent=35 // pred_check
          %p259 = pneg %p258
        $region54: #{tpu_custom_call.1} parent=35 // pred_check_branch
          %261 = sbr.rel (%p259) target = $region56
        $region55: #{tpu_custom_call.1} parent=35 // pred_region
          %s262 = scalar_lea.smem [#allocation2], 0
          %263 = sst [smem:[%s262]] 0.0
          %s264 = scalar_lea.smem [#allocation2], 1
          %265 = sst [smem:[%s264]] 0.0
        $region56: #{tpu_custom_call.1} parent=35 // pred_fallthru
          _
        %v266 = vld [vmem:[%s224] sm:$0x3f]
        %v267 = vld [vmem:[%s233] sm:$0x3f]
        %v268 = vmax.f32 %v266, 0.0
        %v269 = vmul.f32 %v266, %v267
        %v270 = vsub.f32 %v268, %v269
        %v271 = vand.u32 2147483647, %v266
        %v272 = vsub.f32 0.0, %v271
        %v273 = vmul.f32 %v272, 1.442695
        %v274 = vpow.pop %v273
        %v275 = vadd.f32 %v274, 1.0
        %v276 = vlog2.pop %v275
        %v277 = vmul.f32 %v276, 0.6931472
        %v278 = vmul.f32 -0.5, %v274
        %v279 = vadd.f32 %v278, 1.0
        %v280 = vmul.f32 %v279, %v274
        %v281 = vand.u32 2147483647, %v274
        %vm282 = vcmp.lt.f32.partialorder %v281, 0.0004427343
        %v283 = vsel %vm282, %v280, %v277
        %v284 = vadd.f32 %v270, %v283
        %vm285 = vcmask 1045504
        %v286 = vsel %vm285, %v267, 0.0
        %v287 = vrot.slane %v286, 4
        %v288 = vadd.f32 %v286, %v287
        %v289 = vrot.slane %v288, 2
        %v290 = vadd.f32 %v288, %v289
        %v291 = vrot.slane %v290, 1
        %v292 = vadd.f32 %v290, %v291
        %s293 = sld [smem:[#allocation2]]
        %v294 = vmul.f32 %v284, %v292
        %v295 = vsel %vm285, %v294, 0.0
        %296 = vadd.xlane.f32.xlu0 %v295
        %v297 = vpop.xlane.xlu0 %296
        %v298 = vrot.slane %v297, 4
        %v299 = vadd.f32 %v297, %v298
        %v300 = vrot.slane %v299, 2
        %v301 = vadd.f32 %v299, %v300
        %v302 = vrot.slane %v301, 1
        %v303 = vadd.f32 %v301, %v302
        %s304 = vtos %v303
        %s305 = sadd.f32 %s293, %s304
        %s306 = scalar_lea.smem [#allocation2], 0
        %307 = sst [smem:[%s306]] %s305
        %s308 = sld [smem:[#allocation2 + $0x1]]
        %vm309 = vcmp.ne.f32.partialorder %v292, 0.0
        %v310 = vsel %vm309, 1.0, 0.0
        %vm311 = vcmask 1040384
        %v312 = vsel %vm311, %v310, 0.0
        %313 = vadd.xlane.f32.xlu0 %v312
        %v314 = vpop.xlane.xlu0 %313
        %v315 = vrot.slane %v314, 4
        %v316 = vadd.f32 %v314, %v315
        %v317 = vrot.slane %v316, 2
        %v318 = vadd.f32 %v316, %v317
        %v319 = vrot.slane %v318, 1
        %v320 = vadd.f32 %v318, %v319
        %s321 = vtos %v320
        %s322 = sadd.f32 %s308, %s321
        %s323 = scalar_lea.smem [#allocation2], 1
        %324 = sst [smem:[%s323]] %s322
        %p325 = scmp.eq.s32.totalorder %s18, 2
        // Predicated region
        $region57: #{tpu_custom_call.1} parent=35 // pred_check
          %p326 = pneg %p325
        $region58: #{tpu_custom_call.1} parent=35 // pred_check_branch
          %328 = sbr.rel (%p326) target = $region60
        $region59: #{tpu_custom_call.1} parent=35 // pred_region
          %v329 = vld [vmem:[#allocation3] sm:$0xff]
          %v330 = vld [vmem:[#allocation6] sm:$0xff]
          %vm331 = vcmask 48128
          %v332 = vsel %vm331, %v329, -inf
          %333 = vmax.xlane.f32.xlu0 %v332
          %v334 = vpop.xlane.xlu0 %333
          %v335 = vsub.f32 %v329, %v334
          %v336 = vmul.f32 %v335, 1.442695
          %v337 = vpow.pop %v336
          %v338 = vsel %vm331, %v337, 0.0
          %339 = vadd.xlane.f32.xlu0 %v338
          %v340 = vpop.xlane.xlu0 %339
          %v341 = vlog2.pop %v340
          %v342 = vmul.f32 %v341, 0.6931472
          %v343 = vsub.f32 %v335, %v342
          %vm344 = vcmp.gt.f32.partialorder %v330, 0.0
          %v345 = vsel %vm344, %v330, 1.0
          %v346 = vlog2.pop %v345
          %v347 = vmul.f32 %v346, 0.6931472
          %v348 = vmul.f32 %v330, %v347
          %v349 = vsel %vm344, %v348, 0.0
          %v350 = vmul.f32 %v330, %v343
          %v351 = vsub.f32 %v349, %v350
          %v352 = vsel %vm331, %v351, 0.0
          %353 = vadd.xlane.f32.xlu0 %v352
          %v354 = vpop.xlane.xlu0 %353
          %vm355 = vcmask 3072
          %v356 = vsel %vm355, %v354, 0.0
          %357 = vadd.xlane.f32.xlu0 %v356
          %v358 = vpop.xlane.xlu0 %357
          %v359 = vrot.slane %v358, 4
          %v360 = vadd.f32 %v358, %v359
          %v361 = vrot.slane %v360, 2
          %v362 = vadd.f32 %v360, %v361
          %v363 = vrot.slane %v362, 1
          %v364 = vadd.f32 %v362, %v363
          %s365 = vtos %v364
          %v367 = vrot.slane %v354, 4
          %v369 = vsel %vm355, %v367, 0.0
          %370 = vadd.xlane.f32.xlu0 %v369
          %v371 = vpop.xlane.xlu0 %370
          %v372 = vrot.slane %v371, 4
          %v373 = vadd.f32 %v371, %v372
          %v374 = vrot.slane %v373, 2
          %v375 = vadd.f32 %v373, %v374
          %v376 = vrot.slane %v375, 1
          %v377 = vadd.f32 %v375, %v376
          %s378 = vtos %v377
          %s379 = sld [smem:[#allocation2]]
          %s380 = sld [smem:[#allocation2 + $0x1]]
          %v381 = vstv %s380
          %v382 = vrcp.pop %v381
          %s383 = vtos %v382
          %s384 = smul.f32 %s379, %s383
          %s385 = smul.f32 %s378, 0.5
          %s386 = sadd.f32 %s365, %s385
          %v387 = vrcp.pop 4.0
          %s388 = vtos %v387
          %s389 = smul.f32 %s386, %s388
          %s390 = smul.f32 %s384, 0.05
          %s391 = sadd.f32 %s389, %s390
          %s392 = scalar_lea.smem [#allocation10], 0
          %393 = sst [smem:[%s392]] %s391
        $region60: #{tpu_custom_call.1} parent=35 // pred_fallthru
          _
        // Predicated region
        $region61: #{tpu_custom_call.1} parent=35 // pred_check
          %p394 = pneg %p125
        $region62: #{tpu_custom_call.1} parent=35 // pred_check_branch
          %396 = sbr.rel (%p394) target = $region64
        $region63: #{tpu_custom_call.1} parent=35 // pred_region
          %s398 = ssub.s32 16, 16
          %399 = vsyncadd [#allocation5], %s398
          %402 = dma.smem_to_hbm [#allocation10], 16, %s4, [#allocation5]
        $region64: #{tpu_custom_call.1} parent=35 // pred_fallthru
          _
        // Predicated region
        $region65: #{tpu_custom_call.1} parent=35 // pred_check
          %p403 = pneg %p125
        $region66: #{tpu_custom_call.1} parent=35 // pred_check_branch
          %405 = sbr.rel (%p403) target = $region68
        $region67: #{tpu_custom_call.1} parent=35 // pred_region
          %406 = dma.done [#allocation5], 16
        $region68: #{tpu_custom_call.1} parent=35 // pred_fallthru
          _
        %407 = sfence
      $region36: #{tpu_custom_call.1} parent=5 // pred_fallthru
        _
      %p408 = scmp.le.s32.totalorder 2, %s13
      // Predicated region
      $region69: #{tpu_custom_call.1} parent=5 // pred_check
        %p409 = pneg %p408
      $region70: #{tpu_custom_call.1} parent=5 // pred_check_branch
        %411 = sbr.rel (%p409) target = $region72
      $region71: #{tpu_custom_call.1} parent=5 // pred_region
        %s412 = ssub.s32 %s13, 2
      $region72: #{tpu_custom_call.1} parent=5 // pred_fallthru
        _
    $region6: #{tpu_custom_call.1} parent=1 // loop_footer
      %s17 = sadd.s32 1, %s13
    $region7: #{tpu_custom_call.1} parent=1 // loop_footer_branch
      %12 = sbr.rel target = $region3
    $region8: #{tpu_custom_call.1} parent=1 // loop_exit
      _
    %413 = vsyncpa [#allocation4], 1
    %s414 = scalar_lea.sflag [#allocation4], 1
    %415 = vsyncpa %s414, 1
    %416 = vsyncpa [#allocation7], 1
    %417 = vsyncpa [#allocation5], 1
    %s418 = scalar_lea.sflag [#allocation5], 1
    %419 = vsyncpa %s418, 1

</llo_original>
